<compile_context>
chip_gen: v5e
topology: v5e:2x2
jax: 0.10.0
libtpu: 0.0.40
codegen_flags: <defaults>
</compile_context>

<pallas_src>
import functools

import jax
import jax.numpy as jnp
from jax.experimental import pallas as pl
from jax.experimental.pallas import tpu as pltpu

LRELU_SLOPE = 0.1
_COMPUTE_DTYPE = jnp.bfloat16      # MXU operand dtype
_ACT_DTYPE = jnp.bfloat16          # inter-layer activation storage dtype


def _pick_th(hout, p, target_m, align=8):
    """Output rows per tile so the matmul M dim (TH*p) is ~target_m."""
    th = min(hout, max(1, -(-target_m // p)))
    if th < hout:
        while th < hout and (th * p) % align != 0:
            th += 1
        if (th * p) % align != 0:
            th = hout                      # fall back to a single (full) tile
    return th


def _vmem_limit(est_bytes):
    """Per-layer VMEM budget: measured blocks + headroom, capped for v7x."""
    return max(16 * 2 ** 20, min(int(est_bytes) + 8 * 2 ** 20, 56 * 2 ** 20))


def _const_spec(block_shape, index_map):
    """BlockSpec for grid-invariant operands (weights / biases).

    Their index_map is constant so they are DMA'd once; request a single
    buffer instead of the default double buffer to halve their VMEM footprint.
    """
    if hasattr(pl, "Buffered"):
        try:
            return pl.BlockSpec(block_shape, index_map, pipeline_mode=pl.Buffered(1))
        except Exception:
            pass
    return pl.BlockSpec(block_shape, index_map)


def _stage1_kernel(x_ref, w_ref, b_ref, o_ref, *, stride, K, TH, P, Cin, Cout):
    """One conv(K,1)/s(stride,1)/p(pad,0) + LeakyReLU on a tile of TH rows.

    x_ref: (stride, Mp, Cin) phase-split, zero-padded input (one batch item);
           phase r, position a  <->  padded input row a*stride + r.
    w_ref: (K*Cin, Cout) bf16 (row k*Cin+ci <-> torch weight [co, ci, k, 0]).
    b_ref: (1, Cout) f32.
    o_ref: (TH*P, Cout) bf16, rows m = (h - h0)*P + p.
    """
    h0 = pl.program_id(1) * TH

    def tap(k):
        q, r = divmod(k, stride)
        start = (h0 + q) * P
        if P % 8 == 0:
            start = pl.multiple_of(start, 8)
        return x_ref[r, pl.ds(start, TH * P), :]               # (TH*P, Cin)

    if Cin == 1:
        # Outer-product path on the VPU (avoid a contraction-dim-1 matmul).
        acc = jnp.zeros((TH * P, Cout), jnp.float32)
        for k in range(K):
            acc = acc + tap(k).astype(jnp.float32) * w_ref[k:k + 1, :].astype(jnp.float32)
    else:
        # im2col: one long-contraction matmul (TH*P, K*Cin) @ (K*Cin, Cout).
        xcol = jnp.concatenate([tap(k).astype(_COMPUTE_DTYPE) for k in range(K)], axis=1)
        acc = jnp.dot(xcol, w_ref[...], preferred_element_type=jnp.float32)

    acc = acc + b_ref[...].astype(jnp.float32)
    acc = jnp.maximum(acc, LRELU_SLOPE * acc)                  # LeakyReLU(0.1)
    o_ref[...] = acc.astype(o_ref.dtype)


def stage1_conv(x_m, h_in, w_col, bias, *, p, stride=3, K=5, pad=2):
    """Conv2d((K,1),(stride,1),(pad,0)) + LeakyReLU on row-merged input.

    x_m: (B, h_in*p, Cin)  ->  ((B, h_out*p, Cout) bf16, h_out).
    """
    B, _, Cin = x_m.shape
    KC, Cout = w_col.shape
    h_out = (h_in + 2 * pad - K) // stride + 1
    target_m = 512 if Cin >= 512 else 256
    TH = _pick_th(h_out, p, target_m)
    n_tiles = -(-h_out // TH)
    q_max = (K - 1) // stride
    # Zero-pad H so every tile's window stays in range and the padded extent
    # splits exactly into `stride` phases.  (Input stays fully resident per
    # batch item; it is DMA'd once per i and reused across all H tiles.)
    hp = max(h_in + 2 * pad, (n_tiles * TH + q_max) * stride)
    hp = -(-hp // stride) * stride
    xp = jnp.pad(x_m, ((0, 0), (pad * p, (hp - h_in - pad) * p), (0, 0)))
    mp = (hp // stride) * p
    xs = xp.reshape(B, hp // stride, stride, p, Cin)
    xs = jnp.transpose(xs, (0, 2, 1, 3, 4)).reshape(B, stride, mp, Cin)

    kernel = functools.partial(_stage1_kernel, stride=stride, K=K, TH=TH,
                               P=p, Cin=Cin, Cout=Cout)
    xb = xs.dtype.itemsize
    ob = jnp.dtype(_ACT_DTYPE).itemsize
    est = (2 * stride * mp * Cin * xb             # double-buffered input block
           + 2 * (KC * Cout * 2 + Cout * 4)       # weights/bias (2x in case Buffered(1) unavailable)
           + 2 * TH * p * Cout * ob               # double-buffered output block
           + TH * p * (K * Cin * 2 + 2 * Cout * 4))   # im2col / accumulator temporaries
    flops = 2 * B * h_out * p * KC * Cout
    bytes_accessed = (int(xs.size) * xb + KC * Cout * 2 + Cout * 4
                      + B * h_out * p * Cout * ob)
    y = pl.pallas_call(
        kernel,
        out_shape=jax.ShapeDtypeStruct((B, h_out * p, Cout), _ACT_DTYPE),
        grid=(B, n_tiles),
        in_specs=[
            pl.BlockSpec((None, stride, mp, Cin), lambda i, j: (i, 0, 0, 0)),
            _const_spec((KC, Cout), lambda i, j: (0, 0)),
            _const_spec((1, Cout), lambda i, j: (0, 0)),
        ],
        out_specs=pl.BlockSpec((None, TH * p, Cout), lambda i, j: (i, j, 0)),
        compiler_params=pltpu.CompilerParams(
            dimension_semantics=("parallel", "parallel"),
            vmem_limit_bytes=_vmem_limit(est),
        ),
        cost_estimate=pl.CostEstimate(flops=flops, transcendentals=0,
                                      bytes_accessed=bytes_accessed),
    )(xs, w_col, bias.reshape(1, Cout))
    return y, h_out


def _stage2_out_kernel(x_ref, w2_ref, b2_ref, wo_ref, bo_ref, s2_ref, out_ref,
                       *, TH, Hout, P, Cin, Cout, K, KO):
    """stage2 conv(5,1)/s1/p2 + LeakyReLU with the out conv(3,1)/s1/p1 fused.

    Computes TH+2 stage2 rows (one halo row each side) and zeroes halo rows
    outside [0, Hout) -- exactly the zero padding the out conv applies to the
    stage2 *output*.

    x_ref : (Mp, Cin) bf16   zero-padded (3 h-rows each side) input, row-merged
    w2_ref: (K*Cin, Cout) bf16      b2_ref: (1, Cout) f32
    wo_ref: (KO, Cout) f32          bo_ref: (1, 1) f32
    s2_ref: (TH*P, Cout) bf16       out_ref: (TH*P, 1) f32
    """
    h0 = pl.program_id(1) * TH
    TE = TH + 2                       # rows computed, incl. halo rows

    def tap(k):
        start = (h0 + k) * P
        if P % 8 == 0:
            start = pl.multiple_of(start, 8)
        return x_ref[pl.ds(start, TE * P), :]                  # (TE*P, Cin)

    # stage2: one im2col matmul over the extended tile (bf16 taps, f32 acc).
    xcol = jnp.concatenate([tap(k).astype(_COMPUTE_DTYPE) for k in range(K)], axis=1)
    acc = jnp.dot(xcol, w2_ref[...], preferred_element_type=jnp.float32)   # (TE*P, Cout)
    acc = acc + b2_ref[...].astype(jnp.float32)
    acc = jnp.maximum(acc, LRELU_SLOPE * acc)
    # Zero rows whose global stage2 row is outside [0, Hout): implements the
    # out conv's zero padding and kills garbage rows of a partial last tile.
    g = h0 - 1 + jax.lax.broadcasted_iota(jnp.int32, (TE * P, 1), 0) // P
    acc = jnp.where(jnp.logical_and(g >= 0, g < Hout), acc, 0.0)
    s2_ref[...] = acc[P:P + TH * P, :].astype(s2_ref.dtype)    # the TH real rows

    # Fused out conv (Cout=1): VPU broadcast-multiply + XLU lane reduction,
    # keeping the MXU free (no N=1 matvec passes) and no extra HBM round trip.
    o_acc = acc[0:TH * P, :] * wo_ref[0:1, :]
    for k in range(1, KO):
        o_acc = o_acc + acc[k * P:(k + TH) * P, :] * wo_ref[k:k + 1, :]
    logits = jnp.sum(o_acc, axis=-1, keepdims=True) + bo_ref[...]
    out_ref[...] = logits.astype(out_ref.dtype)


def stage2_and_out(x_m, h_in, w2_col, b2, wo, bo, *, p):
    """Fused stage2 conv + LeakyReLU and final (3,1) Cout=1 conv."""
    B, _, Cin = x_m.shape
    Cout = w2_col.shape[1]
    K, KO = 5, 3
    h_out = h_in                                  # stride 1, pad 2, K 5
    TH = _pick_th(h_out, p, 512)
    n_tiles = -(-h_out // TH)
    hp = max(h_in + 6, n_tiles * TH + 6)          # pad 2 (+1 halo row) each side
    xp = jnp.pad(x_m, ((0, 0), (3 * p, (hp - h_in - 3) * p), (0, 0)))
    mp = hp * p

    kernel = functools.partial(_stage2_out_kernel, TH=TH, Hout=h_out, P=p,
                               Cin=Cin, Cout=Cout, K=K, KO=KO)
    xb = xp.dtype.itemsize
    ab = jnp.dtype(_ACT_DTYPE).itemsize
    est = (2 * mp * Cin * xb
           + 2 * (K * Cin * Cout * 2 + KO * Cout * 4 + (Cout + 1) * 4)
           + 2 * TH * p * (Cout * ab + 4)
           + (TH + 2) * p * (K * Cin * 2 + 3 * Cout * 4))
    flops = 2 * B * h_out * p * (K * Cin * Cout + KO * Cout)
    bytes_accessed = (int(xp.size) * xb + K * Cin * Cout * 2 + KO * Cout * 4
                      + B * h_out * p * (Cout * ab + 4))
    s2, logits = pl.pallas_call(
        kernel,
        out_shape=(jax.ShapeDtypeStruct((B, h_out * p, Cout), _ACT_DTYPE),
                   jax.ShapeDtypeStruct((B, h_out * p, 1), jnp.float32)),
        grid=(B, n_tiles),
        in_specs=[
            pl.BlockSpec((None, mp, Cin), lambda i, j: (i, 0, 0)),
            _const_spec((K * Cin, Cout), lambda i, j: (0, 0)),
            _const_spec((1, Cout), lambda i, j: (0, 0)),
            _const_spec((KO, Cout), lambda i, j: (0, 0)),
            _const_spec((1, 1), lambda i, j: (0, 0)),
        ],
        out_specs=(pl.BlockSpec((None, TH * p, Cout), lambda i, j: (i, j, 0)),
                   pl.BlockSpec((None, TH * p, 1), lambda i, j: (i, j, 0))),
        compiler_params=pltpu.CompilerParams(
            dimension_semantics=("parallel", "parallel"),
            vmem_limit_bytes=_vmem_limit(est),
        ),
        cost_estimate=pl.CostEstimate(flops=flops, transcendentals=0,
                                      bytes_accessed=bytes_accessed),
    )(xp, w2_col, b2.reshape(1, Cout), wo, bo.reshape(1, 1))
    return s2, logits, h_out


def _to_nchw(x_m, h, p):
    """(B, h*p, C) row-merged -> torch NCHW (B, C, h, p) float32."""
    B, _, C = x_m.shape
    return jnp.transpose(x_m.reshape(B, h, p, C), (0, 3, 1, 2)).astype(jnp.float32)


def init_params(key):
    """Synthetic MPD params; conv weights stored bf16 in im2col layout (K*Cin, Cout)."""
    dims = [1, 32, 128, 512, 1024]
    params = {}
    keys = jax.random.split(key, 12)
    ki = 0
    for i in range(4):
        cin, cout = dims[i], dims[i + 1]
        scale = 1.0 / jnp.sqrt(5.0 * cin)
        w = scale * jax.random.normal(keys[ki], (5, cin, cout), jnp.float32); ki += 1
        params[f"s1_{i}_w"] = w.reshape(5 * cin, cout).astype(jnp.bfloat16)
        params[f"s1_{i}_b"] = 0.01 * jax.random.normal(keys[ki], (cout,), jnp.float32); ki += 1
    scale = 1.0 / jnp.sqrt(5.0 * 1024)
    w = scale * jax.random.normal(keys[ki], (5, 1024, 1024), jnp.float32); ki += 1
    params["s2_w"] = w.reshape(5 * 1024, 1024).astype(jnp.bfloat16)
    params["s2_b"] = 0.01 * jax.random.normal(keys[ki], (1024,), jnp.float32); ki += 1
    scale = 1.0 / jnp.sqrt(3.0 * 1024)
    # out conv weight kept f32 (tiny) in (KO, Cout) layout for the VPU path.
    params["out_w"] = scale * jax.random.normal(keys[ki], (3, 1024), jnp.float32); ki += 1
    params["out_b"] = 0.01 * jax.random.normal(keys[ki], (1,), jnp.float32); ki += 1
    return params


def mpd_forward(W, params, p):
    """Matches MPD.forward: (flattened logits (b, H_out*p), fmap list in NCHW)."""
    b, t = W.shape
    if t % p != 0:
        n_pad = p - t % p
        W = jnp.pad(W, ((0, 0), (0, n_pad)), mode="reflect")
        t = t + n_pad
    h = t // p
    x = W.reshape(b, t, 1)                        # row-merged (B, H*P, C=1), f32
    fmap = []
    for i in range(4):                            # stage1: conv(5,1)/s3/p2 + LReLU
        x, h = stage1_conv(x, h, params[f"s1_{i}_w"], params[f"s1_{i}_b"], p=p)
        fmap.append(_to_nchw(x, h, p))
    # stage2 conv(5,1)/s1/p2 + LReLU, with the out conv(3,1)/s1/p1 fused in.
    s2, logits, h = stage2_and_out(x, h, params["s2_w"], params["s2_b"],
                                   params["out_w"], params["out_b"], p=p)
    fmap.append(_to_nchw(s2, h, p))
    out_nchw = _to_nchw(logits, h, p)             # (B, 1, H, P)
    fmap.append(out_nchw)
    flat = out_nchw.reshape(b, -1)                # torch.flatten(W, 1, -1)
    return flat, fmap


if __name__ == "__main__":
    key = jax.random.PRNGKey(0)
    pkey, xkey = jax.random.split(key)
    p = 8
    b, t = 2, 122                                 # t % p != 0 -> reflect-pad branch
    params = init_params(pkey)
    W = jax.random.normal(xkey, (b, t), jnp.float32)

    out, fmap = mpd_forward(W, params, p)
    out = jax.block_until_ready(out)
    for f in fmap:
        jax.block_until_ready(f)

    assert out.shape == (b, fmap[-1].shape[2] * p), out.shape
    assert len(fmap) == 6
    print("KERNEL_OK")
</pallas_src>

<mosaic_0001>
module attributes {stable_mosaic.version = 11 : i64} {
  func.func @_stage1_kernel(%arg0: i32, %arg1: i32, %arg2: memref<1x3x56x1xf32, #tpu.memory_space<vmem>>, %arg3: memref<5x32xbf16, #tpu.memory_space<vmem>>, %arg4: memref<1x32xf32, #tpu.memory_space<vmem>>, %arg5: memref<1x48x32xbf16, #tpu.memory_space<vmem>>) attributes {dimension_semantics = [#tpu.dimension_semantics<parallel>, #tpu.dimension_semantics<parallel>], iteration_bounds = array<i64: 2, 1>, scalar_prefetch = 0 : i64, scratch_operands = 0 : i64, tpu.core_type = #tpu.core_type<tc>, window_params = [{transform_indices = @transform_0, window_bounds = array<i64: 1, 3, 56, 1>}, {pipeline_mode = #tpu.pipeline_mode<synchronous>, transform_indices = @transform_1, window_bounds = array<i64: 5, 32>}, {pipeline_mode = #tpu.pipeline_mode<synchronous>, transform_indices = @transform_2, window_bounds = array<i64: 1, 32>}, {transform_indices = @transform_3, window_bounds = array<i64: 1, 48, 32>}]} {
    %c6_i32 = arith.constant 6 : i32
    %0 = arith.muli %arg1, %c6_i32 : i32
    %cst = arith.constant 0.000000e+00 : f32
    %1 = vector.broadcast %cst : f32 to vector<48x32xf32>
    %c0_i32 = arith.constant 0 : i32
    %2 = arith.addi %0, %c0_i32 : i32
    %c8_i32 = arith.constant 8 : i32
    %3 = arith.muli %2, %c8_i32 : i32
    %4 = tpu.assume_multiple %3, 8 : i32
    %c0 = arith.constant 0 : index
    %c0_0 = arith.constant 0 : index
    %5 = arith.index_cast %4 : i32 to index
    %c0_1 = arith.constant 0 : index
    %6 = vector.load %arg2[%c0, %c0_0, %5, %c0_1] : memref<1x3x56x1xf32, #tpu.memory_space<vmem>>, vector<1x1x48x1xf32>
    %7 = vector.shape_cast %6 : vector<1x1x48x1xf32> to vector<48x1xf32>
    %c0_2 = arith.constant 0 : index
    %c0_3 = arith.constant 0 : index
    %8 = vector.load %arg3[%c0_2, %c0_3] : memref<5x32xbf16, #tpu.memory_space<vmem>>, vector<1x32xbf16>
    %9 = arith.extf %8 : vector<1x32xbf16> to vector<1x32xf32>
    %10 = vector.broadcast %7 : vector<48x1xf32> to vector<48x32xf32>
    %11 = vector.broadcast %9 : vector<1x32xf32> to vector<48x32xf32>
    %12 = arith.mulf %10, %11 : vector<48x32xf32>
    %13 = arith.addf %1, %12 : vector<48x32xf32>
    %c0_i32_4 = arith.constant 0 : i32
    %14 = arith.addi %0, %c0_i32_4 : i32
    %c8_i32_5 = arith.constant 8 : i32
    %15 = arith.muli %14, %c8_i32_5 : i32
    %16 = tpu.assume_multiple %15, 8 : i32
    %c0_6 = arith.constant 0 : index
    %c1 = arith.constant 1 : index
    %17 = arith.index_cast %16 : i32 to index
    %c0_7 = arith.constant 0 : index
    %18 = vector.load %arg2[%c0_6, %c1, %17, %c0_7] : memref<1x3x56x1xf32, #tpu.memory_space<vmem>>, vector<1x1x48x1xf32>
    %19 = vector.shape_cast %18 : vector<1x1x48x1xf32> to vector<48x1xf32>
    %c1_8 = arith.constant 1 : index
    %c0_9 = arith.constant 0 : index
    %20 = vector.load %arg3[%c1_8, %c0_9] : memref<5x32xbf16, #tpu.memory_space<vmem>>, vector<1x32xbf16>
    %21 = arith.extf %20 : vector<1x32xbf16> to vector<1x32xf32>
    %22 = vector.broadcast %19 : vector<48x1xf32> to vector<48x32xf32>
    %23 = vector.broadcast %21 : vector<1x32xf32> to vector<48x32xf32>
    %24 = arith.mulf %22, %23 : vector<48x32xf32>
    %25 = arith.addf %13, %24 : vector<48x32xf32>
    %c0_i32_10 = arith.constant 0 : i32
    %26 = arith.addi %0, %c0_i32_10 : i32
    %c8_i32_11 = arith.constant 8 : i32
    %27 = arith.muli %26, %c8_i32_11 : i32
    %28 = tpu.assume_multiple %27, 8 : i32
    %c0_12 = arith.constant 0 : index
    %c2 = arith.constant 2 : index
    %29 = arith.index_cast %28 : i32 to index
    %c0_13 = arith.constant 0 : index
    %30 = vector.load %arg2[%c0_12, %c2, %29, %c0_13] : memref<1x3x56x1xf32, #tpu.memory_space<vmem>>, vector<1x1x48x1xf32>
    %31 = vector.shape_cast %30 : vector<1x1x48x1xf32> to vector<48x1xf32>
    %c2_14 = arith.constant 2 : index
    %c0_15 = arith.constant 0 : index
    %32 = vector.load %arg3[%c2_14, %c0_15] : memref<5x32xbf16, #tpu.memory_space<vmem>>, vector<1x32xbf16>
    %33 = arith.extf %32 : vector<1x32xbf16> to vector<1x32xf32>
    %34 = vector.broadcast %31 : vector<48x1xf32> to vector<48x32xf32>
    %35 = vector.broadcast %33 : vector<1x32xf32> to vector<48x32xf32>
    %36 = arith.mulf %34, %35 : vector<48x32xf32>
    %37 = arith.addf %25, %36 : vector<48x32xf32>
    %c1_i32 = arith.constant 1 : i32
    %38 = arith.addi %0, %c1_i32 : i32
    %c8_i32_16 = arith.constant 8 : i32
    %39 = arith.muli %38, %c8_i32_16 : i32
    %40 = tpu.assume_multiple %39, 8 : i32
    %c0_17 = arith.constant 0 : index
    %c0_18 = arith.constant 0 : index
    %41 = arith.index_cast %40 : i32 to index
    %c0_19 = arith.constant 0 : index
    %42 = vector.load %arg2[%c0_17, %c0_18, %41, %c0_19] : memref<1x3x56x1xf32, #tpu.memory_space<vmem>>, vector<1x1x48x1xf32>
    %43 = vector.shape_cast %42 : vector<1x1x48x1xf32> to vector<48x1xf32>
    %c3 = arith.constant 3 : index
    %c0_20 = arith.constant 0 : index
    %44 = vector.load %arg3[%c3, %c0_20] : memref<5x32xbf16, #tpu.memory_space<vmem>>, vector<1x32xbf16>
    %45 = arith.extf %44 : vector<1x32xbf16> to vector<1x32xf32>
    %46 = vector.broadcast %43 : vector<48x1xf32> to vector<48x32xf32>
    %47 = vector.broadcast %45 : vector<1x32xf32> to vector<48x32xf32>
    %48 = arith.mulf %46, %47 : vector<48x32xf32>
    %49 = arith.addf %37, %48 : vector<48x32xf32>
    %c1_i32_21 = arith.constant 1 : i32
    %50 = arith.addi %0, %c1_i32_21 : i32
    %c8_i32_22 = arith.constant 8 : i32
    %51 = arith.muli %50, %c8_i32_22 : i32
    %52 = tpu.assume_multiple %51, 8 : i32
    %c0_23 = arith.constant 0 : index
    %c1_24 = arith.constant 1 : index
    %53 = arith.index_cast %52 : i32 to index
    %c0_25 = arith.constant 0 : index
    %54 = vector.load %arg2[%c0_23, %c1_24, %53, %c0_25] : memref<1x3x56x1xf32, #tpu.memory_space<vmem>>, vector<1x1x48x1xf32>
    %55 = vector.shape_cast %54 : vector<1x1x48x1xf32> to vector<48x1xf32>
    %c4 = arith.constant 4 : index
    %c0_26 = arith.constant 0 : index
    %56 = vector.load %arg3[%c4, %c0_26] : memref<5x32xbf16, #tpu.memory_space<vmem>>, vector<1x32xbf16>
    %57 = arith.extf %56 : vector<1x32xbf16> to vector<1x32xf32>
    %58 = vector.broadcast %55 : vector<48x1xf32> to vector<48x32xf32>
    %59 = vector.broadcast %57 : vector<1x32xf32> to vector<48x32xf32>
    %60 = arith.mulf %58, %59 : vector<48x32xf32>
    %61 = arith.addf %49, %60 : vector<48x32xf32>
    %c0_27 = arith.constant 0 : index
    %c0_28 = arith.constant 0 : index
    %62 = vector.load %arg4[%c0_27, %c0_28] : memref<1x32xf32, #tpu.memory_space<vmem>>, vector<1x32xf32>
    %63 = vector.broadcast %62 : vector<1x32xf32> to vector<48x32xf32>
    %64 = arith.addf %61, %63 : vector<48x32xf32>
    %cst_29 = arith.constant 1.000000e-01 : f32
    %65 = vector.broadcast %cst_29 : f32 to vector<48x32xf32>
    %66 = arith.mulf %65, %64 : vector<48x32xf32>
    %67 = arith.maximumf %64, %66 : vector<48x32xf32>
    %68 = arith.truncf %67 : vector<48x32xf32> to vector<48x32xbf16>
    %c0_30 = arith.constant 0 : index
    %c0_31 = arith.constant 0 : index
    %c0_32 = arith.constant 0 : index
    %69 = vector.load %arg5[%c0_30, %c0_31, %c0_32] : memref<1x48x32xbf16, #tpu.memory_space<vmem>>, vector<1x48x32xbf16>
    %70 = vector.shape_cast %69 : vector<1x48x32xbf16> to vector<48x32xbf16>
    %71 = vector.shape_cast %68 : vector<48x32xbf16> to vector<1x48x32xbf16>
    tpu.vector_store %arg5[%c0_30, %c0_31, %c0_32], %71 {strides = array<i32>} : memref<1x48x32xbf16, #tpu.memory_space<vmem>>, vector<1x48x32xbf16>,
    return
  }
  func.func @transform_0(%arg0: i32, %arg1: i32) -> (i32, i32, i32, i32) {
    %c0_i32 = arith.constant 0 : i32
    %c0_i32_0 = arith.constant 0 : i32
    %c0_i32_1 = arith.constant 0 : i32
    %c0_i32_2 = arith.constant 0 : i32
    return %arg0, %c0_i32, %c0_i32_0, %c0_i32_1 : i32, i32, i32, i32
  }
  func.func @transform_1(%arg0: i32, %arg1: i32) -> (i32, i32) {
    %c0_i32 = arith.constant 0 : i32
    %c0_i32_0 = arith.constant 0 : i32
    %c0_i32_1 = arith.constant 0 : i32
    return %c0_i32, %c0_i32_0 : i32, i32
  }
  func.func @transform_2(%arg0: i32, %arg1: i32) -> (i32, i32) {
    %c0_i32 = arith.constant 0 : i32
    %c0_i32_0 = arith.constant 0 : i32
    %c0_i32_1 = arith.constant 0 : i32
    return %c0_i32, %c0_i32_0 : i32, i32
  }
  func.func @transform_3(%arg0: i32, %arg1: i32) -> (i32, i32, i32) {
    %c0_i32 = arith.constant 0 : i32
    %c0_i32_0 = arith.constant 0 : i32
    return %arg0, %arg1, %c0_i32 : i32, i32, i32
  }
}

</mosaic_0001>

<llo_original>
// kernel: tpu_custom_call.1
$region0: #{tpu_custom_call.1}
  #allocation0 [shape = 'u32[]', space=smem, size = 0x4, offset = 0x4, fixed_abs, tag = 'smem constant byte address 0x4 - core index']
  #allocation1 [shape = 'u32[72,128]{1,0:T(1,128)}', space=vmem, size = 0x9000, scoped, tag = 'internal scratch']
  %s0 = inlined_call_operand.vmem [shape: f32[2,3,56,1], index: 0, kind: input, shape index: {}]
  %s1 = inlined_call_operand.vmem [shape: bf16[5,32], index: 1, kind: input, shape index: {}]
  %s2 = inlined_call_operand.vmem [shape: f32[1,32], index: 2, kind: input, shape index: {}]
  %s3 = inlined_call_operand.vmem [shape: bf16[2,48,32], index: 3, kind: output, shape index: {}]
  %s4 = sld [smem:[#allocation0]]
  $region45: #{tpu_custom_call.1} parent=0
    _
  %s6 = ssub.s32 1, %s4
  %s7 = scalar_select 0, %s6, %s4
  loop: start=0, step=1, limit=4
  $region2: #{tpu_custom_call.1} parent=0 // loop_pre_header
    _
  $region3: #{tpu_custom_call.1} parent=0 // loop_header
    %s9 = sphi 0, %s13
    %p10 = scmp.ge.s32.totalorder %s9, 4
    %s16 = sphi 0, %s28
    %s17 = sphi 0, %s24
    %s18 = sphi 0, %s16
    %s19 = sphi 0, %s17
    %s20 = sphi 0, %s18
    %s21 = sphi 0, %s19
    %s31 = sphi 0, %s33
    %s34 = sphi 0, %s31
    %s35 = sphi 0, %s34
    %s51 = sphi 0, %s35
    %s55 = sphi 0, %s55
    %s57 = sphi 0, %s55
    %s58 = sphi 0, %s57
    %s72 = sphi 0, %s58
    %s76 = sphi 0, %s76
    %s78 = sphi 0, %s76
    %s79 = sphi 0, %s78
    %s93 = sphi 0, %s79
    %s101 = sphi 0, %s103
    %s104 = sphi 0, %s101
    %s105 = sphi 0, %s104
    %s121 = sphi 0, %s105
  $region4: #{tpu_custom_call.1} parent=0 // loop_header_branch
    %12 = sbr.rel (%p10) target = $region8
  $region5: #{tpu_custom_call.1} parent=0 // loop_body
    %s14 = ssub.s32 %s9, 1
    %s15 = ssub.s32 %s9, 2
    %s22 = sadd.s32 1, %s17
    %p23 = scmp.ge.s32.totalorder %s22, 1
    %s24 = scalar_select %p23, 0, %s22
    %s25 = sadd.s32 1, %s16
    %s26 = scalar_select %p23, %s25, %s16
    %p27 = scmp.ge.s32.totalorder %s26, 2
    %s28 = scalar_select %p27, 0, %s26
    %s29 = ssub.s32 %s16, %s28
    %p30 = scmp.eq.s32.totalorder %s29, 0
    %s32 = sadd.s32 %s31, 1
    %s33 = scalar_select %p30, %s31, %s32
    %p36 = pneg %p30
    %p37 = scmp.eq.s32.totalorder %s9, 1
    %p38 = por %p36, %p37
    %p39 = scmp.ne.s32.totalorder %s31, %s34
    %p40 = scmp.eq.s32.totalorder %s9, 0
    %p41 = por %p39, %p40
    %p42 = scmp.ne.s32.totalorder %s31, %s34
    %p43 = scmp.eq.s32.totalorder %s14, 1
    %p44 = por %p42, %p43
    %p45 = scmp.ne.s32.totalorder %s34, %s35
    %p46 = scmp.eq.s32.totalorder %s14, 0
    %p47 = por %p45, %p46
    %p48 = scmp.ne.s32.totalorder %s34, %s35
    %p49 = scmp.eq.s32.totalorder %s15, 1
    %p50 = por %p48, %p49
    %p52 = scmp.ne.s32.totalorder %s35, %s51
    %p53 = scmp.eq.s32.totalorder %s15, 0
    %p54 = por %p52, %p53
    %s56 = sadd.s32 %s55, 1
    %p59 = scmp.eq.s32.totalorder %s9, 1
    %p60 = scmp.ne.s32.totalorder %s55, %s57
    %p61 = scmp.eq.s32.totalorder %s9, 0
    %p62 = por %p60, %p61
    %p63 = scmp.ne.s32.totalorder %s55, %s57
    %p64 = scmp.eq.s32.totalorder %s14, 1
    %p65 = por %p63, %p64
    %p66 = scmp.ne.s32.totalorder %s57, %s58
    %p67 = scmp.eq.s32.totalorder %s14, 0
    %p68 = por %p66, %p67
    %p69 = scmp.ne.s32.totalorder %s57, %s58
    %p70 = scmp.eq.s32.totalorder %s15, 1
    %p71 = por %p69, %p70
    %p73 = scmp.ne.s32.totalorder %s58, %s72
    %p74 = scmp.eq.s32.totalorder %s15, 0
    %p75 = por %p73, %p74
    %s77 = sadd.s32 %s76, 1
    %p80 = scmp.eq.s32.totalorder %s9, 1
    %p81 = scmp.ne.s32.totalorder %s76, %s78
    %p82 = scmp.eq.s32.totalorder %s9, 0
    %p83 = por %p81, %p82
    %p84 = scmp.ne.s32.totalorder %s76, %s78
    %p85 = scmp.eq.s32.totalorder %s14, 1
    %p86 = por %p84, %p85
    %p87 = scmp.ne.s32.totalorder %s78, %s79
    %p88 = scmp.eq.s32.totalorder %s14, 0
    %p89 = por %p87, %p88
    %p90 = scmp.ne.s32.totalorder %s78, %s79
    %p91 = scmp.eq.s32.totalorder %s15, 1
    %p92 = por %p90, %p91
    %p94 = scmp.ne.s32.totalorder %s79, %s93
    %p95 = scmp.eq.s32.totalorder %s15, 0
    %p96 = por %p94, %p95
    %s97 = ssub.s32 %s16, %s28
    %s98 = ssub.s32 %s17, %s24
    %s99 = sor.u32 %s97, %s98
    %p100 = scmp.eq.s32.totalorder %s99, 0
    %s102 = sadd.s32 %s101, 1
    %s103 = scalar_select %p100, %s101, %s102
    %p106 = pneg %p100
    %p107 = scmp.eq.s32.totalorder %s9, 1
    %p108 = por %p106, %p107
    %p109 = scmp.ne.s32.totalorder %s101, %s104
    %p110 = scmp.eq.s32.totalorder %s9, 0
    %p111 = por %p109, %p110
    %p112 = scmp.ne.s32.totalorder %s101, %s104
    %p113 = scmp.eq.s32.totalorder %s14, 1
    %p114 = por %p112, %p113
    %p115 = scmp.ne.s32.totalorder %s104, %s105
    %p116 = scmp.eq.s32.totalorder %s14, 0
    %p117 = por %p115, %p116
    %p118 = scmp.ne.s32.totalorder %s104, %s105
    %p119 = scmp.eq.s32.totalorder %s15, 1
    %p120 = por %p118, %p119
    %p122 = scmp.ne.s32.totalorder %s105, %s121
    %p123 = scmp.eq.s32.totalorder %s15, 0
    %p124 = por %p122, %p123
    %p125 = scmp.le.s32.totalorder 1, %s9
    %p126 = scmp.lt.s32.totalorder %s9, 3
    %p127 = pnand %p125, %p126
    %p128 = pneg %p127
    // Predicated region
    $region9: #{tpu_custom_call.1} parent=5 // pred_check
      _
    $region10: #{tpu_custom_call.1} parent=5 // pred_check_branch
      %130 = sbr.rel (%p127) target = $region12
    $region11: #{tpu_custom_call.1} parent=5 // pred_region
      %s131 = ssub.s32 %s9, 1
      // Predicated region
      $region13: #{tpu_custom_call.1} parent=11 // pred_check
        %p132 = pneg %p68
      $region14: #{tpu_custom_call.1} parent=11 // pred_check_branch
        %134 = sbr.rel (%p132) target = $region16
      $region15: #{tpu_custom_call.1} parent=11 // pred_region
        _
      $region16: #{tpu_custom_call.1} parent=11 // pred_fallthru
        _
      // Predicated region
      $region17: #{tpu_custom_call.1} parent=11 // pred_check
        %p135 = pneg %p89
      $region18: #{tpu_custom_call.1} parent=11 // pred_check_branch
        %137 = sbr.rel (%p135) target = $region20
      $region19: #{tpu_custom_call.1} parent=11 // pred_region
        _
      $region20: #{tpu_custom_call.1} parent=11 // pred_fallthru
        _
    $region12: #{tpu_custom_call.1} parent=5 // pred_fallthru
      _
    %p138 = scmp.lt.s32.totalorder %s9, 2
    // Predicated region
    $region21: #{tpu_custom_call.1} parent=5 // pred_check
      %p139 = pneg %p138
    $region22: #{tpu_custom_call.1} parent=5 // pred_check_branch
      %141 = sbr.rel (%p139) target = $region24
    $region23: #{tpu_custom_call.1} parent=5 // pred_region
      // Predicated region
      $region25: #{tpu_custom_call.1} parent=23 // pred_check
        %p142 = pneg %p41
      $region26: #{tpu_custom_call.1} parent=23 // pred_check_branch
        %144 = sbr.rel (%p142) target = $region28
      $region27: #{tpu_custom_call.1} parent=23 // pred_region
        %p145 = scmp.lt.s32.totalorder %s16, 1
        %s146 = scalar_select %p145, %s16, 1
        %s147 = smul.addr %s146, 21
        %s148 = smul.addr %s147, 8
        %s149 = scalar_lea.vmem %s0, %s148
      $region28: #{tpu_custom_call.1} parent=23 // pred_fallthru
        _
    $region24: #{tpu_custom_call.1} parent=5 // pred_fallthru
      _
    %p150 = scmp.le.s32.totalorder 1, %s9
    %p151 = scmp.lt.s32.totalorder %s9, 3
    %p152 = pnand %p150, %p151
    %p153 = pneg %p152
    // Predicated region
    $region29: #{tpu_custom_call.1} parent=5 // pred_check
      _
    $region30: #{tpu_custom_call.1} parent=5 // pred_check_branch
      %155 = sbr.rel (%p152) target = $region32
    $region31: #{tpu_custom_call.1} parent=5 // pred_region
      %s156 = ssub.s32 %s9, 1
      %p157 = scmp.lt.s32.totalorder %s18, 1
      %s158 = scalar_select %p157, %s18, 1
      %s159 = smul.addr %s158, 21
      %s160 = smul.addr %s159, 8
      %s161 = scalar_lea.vmem %s0, %s160
      %p162 = pneg %p47
      %p163 = pneg %p44
      %p164 = pneg %p68
      %p165 = pneg %p65
      %p166 = pneg %p89
      %p167 = pneg %p86
      %p168 = pneg %p117
      %p169 = pneg %p114
      %s170 = smul.u32 6, %s19
      %p171 = scmp.lt.s32.totalorder %s18, 1
      %s172 = scalar_select %p171, %s18, 1
      %p173 = scmp.lt.s32.totalorder %s170, 5
      %s174 = scalar_select %p173, %s170, 5
      %s175 = smul.addr %s172, 6
      %s176 = sadd.s32 %s174, %s175
      %s177 = smul.addr %s176, 4
      %s178 = scalar_lea.vmem %s3, %s177
      %p179 = scmp.lt.s32.totalorder %s18, 1
      %s180 = scalar_select %p179, %s18, 1
      %s181 = smul.addr %s180, 21
      %s182 = smul.addr %s181, 8
      %s183 = scalar_lea.vmem %s0, %s182
      %s184 = smul.u32 6, %s19
      %p185 = scmp.lt.s32.totalorder %s18, 1
      %s186 = scalar_select %p185, %s18, 1
      %p187 = scmp.lt.s32.totalorder %s184, 5
      %s188 = scalar_select %p187, %s184, 5
      %s189 = smul.addr %s186, 6
      %s190 = sadd.s32 %s188, %s189
      %s191 = smul.addr %s190, 4
      %s192 = scalar_lea.vmem %s3, %s191
      %s193 = smul.u32 6, %s19
      %s194 = smul.u32 %s19, 6
      %s195 = smul.u32 %s19, 48
      %s196 = scalar_lea.vmem %s183, %s195
      %v197 = vld [vmem:[%s196] sm:$0xff]
      %v198 = vld [vmem:[%s196 + $0x8] sm:$0xff]
      %v199 = vld [vmem:[%s196 + $0x10] sm:$0xff]
      %v200 = vld [vmem:[%s196 + $0x18] sm:$0xff]
      %v201 = vld [vmem:[%s196 + $0x20] sm:$0xff]
      %v202 = vld [vmem:[%s196 + $0x28] sm:$0xff]
      %v203 = vld [vmem:[%s1] sm:$0x1]
      %v204 = vunpack.c.l.bf16 %v203
      %206 = vset.pattern.permute.xlu0 0
      %207 = vperm.xlu0 %206, %v197
      %v208 = vpop.permute.xlu0 %207
      %211 = vset.pattern.permute.xlu0 0
      %212 = vperm.xlu0 %211, %v198
      %v213 = vpop.permute.xlu0 %212
      %216 = vset.pattern.permute.xlu0 0
      %217 = vperm.xlu0 %216, %v199
      %v218 = vpop.permute.xlu0 %217
      %221 = vset.pattern.permute.xlu0 0
      %222 = vperm.xlu0 %221, %v200
      %v223 = vpop.permute.xlu0 %222
      %226 = vset.pattern.permute.xlu0 0
      %227 = vperm.xlu0 %226, %v201
      %v228 = vpop.permute.xlu0 %227
      %231 = vset.pattern.permute.xlu0 0
      %232 = vperm.xlu0 %231, %v202
      %v233 = vpop.permute.xlu0 %232
      %v235 = vperm.slane %v204, 0
      %v236 = vmul.f32 %v208, %v235
      %v237 = vmul.f32 %v213, %v235
      %v238 = vmul.f32 %v218, %v235
      %v239 = vmul.f32 %v223, %v235
      %v240 = vmul.f32 %v228, %v235
      %v241 = vmul.f32 %v233, %v235
      %v242 = vadd.f32 %v236, 0.0
      %v243 = vadd.f32 %v237, 0.0
      %v244 = vadd.f32 %v238, 0.0
      %v245 = vadd.f32 %v239, 0.0
      %v246 = vadd.f32 %v240, 0.0
      %v247 = vadd.f32 %v241, 0.0
      %s248 = sadd.s32 %s195, 56
      %s249 = scalar_lea.vmem %s183, %s248
      %v250 = vld [vmem:[%s249] sm:$0xff]
      %v251 = vld [vmem:[%s249 + $0x8] sm:$0xff]
      %v252 = vld [vmem:[%s249 + $0x10] sm:$0xff]
      %v253 = vld [vmem:[%s249 + $0x18] sm:$0xff]
      %v254 = vld [vmem:[%s249 + $0x20] sm:$0xff]
      %v255 = vld [vmem:[%s249 + $0x28] sm:$0xff]
      %257 = vset.pattern.permute.xlu0 0
      %258 = vperm.xlu0 %257, %v250
      %v259 = vpop.permute.xlu0 %258
      %262 = vset.pattern.permute.xlu0 0
      %263 = vperm.xlu0 %262, %v251
      %v264 = vpop.permute.xlu0 %263
      %267 = vset.pattern.permute.xlu0 0
      %268 = vperm.xlu0 %267, %v252
      %v269 = vpop.permute.xlu0 %268
      %272 = vset.pattern.permute.xlu0 0
      %273 = vperm.xlu0 %272, %v253
      %v274 = vpop.permute.xlu0 %273
      %277 = vset.pattern.permute.xlu0 0
      %278 = vperm.xlu0 %277, %v254
      %v279 = vpop.permute.xlu0 %278
      %282 = vset.pattern.permute.xlu0 0
      %283 = vperm.xlu0 %282, %v255
      %v284 = vpop.permute.xlu0 %283
      %v286 = vperm.slane %v204, 1
      %v287 = vmul.f32 %v259, %v286
      %v288 = vmul.f32 %v264, %v286
      %v289 = vmul.f32 %v269, %v286
      %v290 = vmul.f32 %v274, %v286
      %v291 = vmul.f32 %v279, %v286
      %v292 = vmul.f32 %v284, %v286
      %v293 = vadd.f32 %v242, %v287
      %v294 = vadd.f32 %v243, %v288
      %v295 = vadd.f32 %v244, %v289
      %v296 = vadd.f32 %v245, %v290
      %v297 = vadd.f32 %v246, %v291
      %v298 = vadd.f32 %v247, %v292
      %s299 = sadd.s32 %s195, 112
      %s300 = scalar_lea.vmem %s183, %s299
      %v301 = vld [vmem:[%s300] sm:$0xff]
      %v302 = vld [vmem:[%s300 + $0x8] sm:$0xff]
      %v303 = vld [vmem:[%s300 + $0x10] sm:$0xff]
      %v304 = vld [vmem:[%s300 + $0x18] sm:$0xff]
      %v305 = vld [vmem:[%s300 + $0x20] sm:$0xff]
      %v306 = vld [vmem:[%s300 + $0x28] sm:$0xff]
      %v307 = vld [vmem:[%s1] sm:$0x2]
      %v308 = vunpack.c.l.bf16 %v307
      %310 = vset.pattern.permute.xlu0 0
      %311 = vperm.xlu0 %310, %v301
      %v312 = vpop.permute.xlu0 %311
      %315 = vset.pattern.permute.xlu0 0
      %316 = vperm.xlu0 %315, %v302
      %v317 = vpop.permute.xlu0 %316
      %320 = vset.pattern.permute.xlu0 0
      %321 = vperm.xlu0 %320, %v303
      %v322 = vpop.permute.xlu0 %321
      %325 = vset.pattern.permute.xlu0 0
      %326 = vperm.xlu0 %325, %v304
      %v327 = vpop.permute.xlu0 %326
      %330 = vset.pattern.permute.xlu0 0
      %331 = vperm.xlu0 %330, %v305
      %v332 = vpop.permute.xlu0 %331
      %335 = vset.pattern.permute.xlu0 0
      %336 = vperm.xlu0 %335, %v306
      %v337 = vpop.permute.xlu0 %336
      %v339 = vperm.slane %v308, 2
      %v340 = vmul.f32 %v312, %v339
      %v341 = vmul.f32 %v317, %v339
      %v342 = vmul.f32 %v322, %v339
      %v343 = vmul.f32 %v327, %v339
      %v344 = vmul.f32 %v332, %v339
      %v345 = vmul.f32 %v337, %v339
      %v346 = vadd.f32 %v293, %v340
      %v347 = vadd.f32 %v294, %v341
      %v348 = vadd.f32 %v295, %v342
      %v349 = vadd.f32 %v296, %v343
      %v350 = vadd.f32 %v297, %v344
      %v351 = vadd.f32 %v298, %v345
      %s352 = sadd.s32 %s194, 1
      %s353 = smul.u32 %s352, 8
      %s354 = scalar_lea.vmem %s183, %s353
      %v355 = vld [vmem:[%s354] sm:$0xff]
      %v356 = vld [vmem:[%s354 + $0x8] sm:$0xff]
      %v357 = vld [vmem:[%s354 + $0x10] sm:$0xff]
      %v358 = vld [vmem:[%s354 + $0x18] sm:$0xff]
      %v359 = vld [vmem:[%s354 + $0x20] sm:$0xff]
      %v360 = vld [vmem:[%s354 + $0x28] sm:$0xff]
      %362 = vset.pattern.permute.xlu0 0
      %363 = vperm.xlu0 %362, %v355
      %v364 = vpop.permute.xlu0 %363
      %367 = vset.pattern.permute.xlu0 0
      %368 = vperm.xlu0 %367, %v356
      %v369 = vpop.permute.xlu0 %368
      %372 = vset.pattern.permute.xlu0 0
      %373 = vperm.xlu0 %372, %v357
      %v374 = vpop.permute.xlu0 %373
      %377 = vset.pattern.permute.xlu0 0
      %378 = vperm.xlu0 %377, %v358
      %v379 = vpop.permute.xlu0 %378
      %382 = vset.pattern.permute.xlu0 0
      %383 = vperm.xlu0 %382, %v359
      %v384 = vpop.permute.xlu0 %383
      %387 = vset.pattern.permute.xlu0 0
      %388 = vperm.xlu0 %387, %v360
      %v389 = vpop.permute.xlu0 %388
      %v391 = vperm.slane %v308, 3
      %v392 = vmul.f32 %v364, %v391
      %v393 = vmul.f32 %v369, %v391
      %v394 = vmul.f32 %v374, %v391
      %v395 = vmul.f32 %v379, %v391
      %v396 = vmul.f32 %v384, %v391
      %v397 = vmul.f32 %v389, %v391
      %v398 = vadd.f32 %v346, %v392
      %v399 = vadd.f32 %v347, %v393
      %v400 = vadd.f32 %v348, %v394
      %v401 = vadd.f32 %v349, %v395
      %v402 = vadd.f32 %v350, %v396
      %v403 = vadd.f32 %v351, %v397
      %s404 = sadd.s32 %s353, 56
      %s405 = scalar_lea.vmem %s183, %s404
      %v406 = vld [vmem:[%s405] sm:$0xff]
      %v407 = vld [vmem:[%s405 + $0x8] sm:$0xff]
      %v408 = vld [vmem:[%s405 + $0x10] sm:$0xff]
      %v409 = vld [vmem:[%s405 + $0x18] sm:$0xff]
      %v410 = vld [vmem:[%s405 + $0x20] sm:$0xff]
      %v411 = vld [vmem:[%s405 + $0x28] sm:$0xff]
      %v412 = vld [vmem:[%s1] sm:$0x4]
      %v413 = vunpack.c.l.bf16 %v412
      %415 = vset.pattern.permute.xlu0 0
      %416 = vperm.xlu0 %415, %v406
      %v417 = vpop.permute.xlu0 %416
      %420 = vset.pattern.permute.xlu0 0
      %421 = vperm.xlu0 %420, %v407
      %v422 = vpop.permute.xlu0 %421
      %425 = vset.pattern.permute.xlu0 0
      %426 = vperm.xlu0 %425, %v408
      %v427 = vpop.permute.xlu0 %426
      %430 = vset.pattern.permute.xlu0 0
      %431 = vperm.xlu0 %430, %v409
      %v432 = vpop.permute.xlu0 %431
      %435 = vset.pattern.permute.xlu0 0
      %436 = vperm.xlu0 %435, %v410
      %v437 = vpop.permute.xlu0 %436
      %440 = vset.pattern.permute.xlu0 0
      %441 = vperm.xlu0 %440, %v411
      %v442 = vpop.permute.xlu0 %441
      %v444 = vperm.slane %v413, 4
      %v445 = vmul.f32 %v417, %v444
      %v446 = vmul.f32 %v422, %v444
      %v447 = vmul.f32 %v427, %v444
      %v448 = vmul.f32 %v432, %v444
      %v449 = vmul.f32 %v437, %v444
      %v450 = vmul.f32 %v442, %v444
      %v451 = vadd.f32 %v398, %v445
      %v452 = vadd.f32 %v399, %v446
      %v453 = vadd.f32 %v400, %v447
      %v454 = vadd.f32 %v401, %v448
      %v455 = vadd.f32 %v402, %v449
      %v456 = vadd.f32 %v403, %v450
      %v457 = vld [vmem:[%s2] sm:$0x1]
      %v459 = vperm.slane %v457, 0
      %v461 = vadd.f32 %v451, %v459
      %v462 = vadd.f32 %v452, %v459
      %v463 = vadd.f32 %v453, %v459
      %v464 = vadd.f32 %v454, %v459
      %v465 = vadd.f32 %v455, %v459
      %v466 = vadd.f32 %v456, %v459
      %v467 = vmul.f32 %v461, 0.1
      %v468 = vmul.f32 %v462, 0.1
      %v469 = vmul.f32 %v463, 0.1
      %v470 = vmul.f32 %v464, 0.1
      %v471 = vmul.f32 %v465, 0.1
      %v472 = vmul.f32 %v466, 0.1
      %v473 = vmax.f32 %v461, %v467
      %v474 = vmax.f32 %v462, %v468
      %v475 = vmax.f32 %v463, %v469
      %v476 = vmax.f32 %v464, %v470
      %v477 = vmax.f32 %v465, %v471
      %v478 = vmax.f32 %v466, %v472
      %v479 = vpack.c.bf16 %v473, %v473
      %v480 = vpack.c.bf16 %v474, %v474
      %v481 = vpack.c.bf16 %v475, %v475
      %v482 = vpack.c.bf16 %v476, %v476
      %v483 = vpack.c.bf16 %v477, %v477
      %v484 = vpack.c.bf16 %v478, %v478
      %vm485 = vcmask 257024
      %486 = vst.msk [vmem:[%s192] sm:$0xf] %vm485, %v479
      %487 = vst.msk [vmem:[%s192 + $0x4] sm:$0xf] %vm485, %v480
      %488 = vst.msk [vmem:[%s192 + $0x8] sm:$0xf] %vm485, %v481
      %489 = vst.msk [vmem:[%s192 + $0xc] sm:$0xf] %vm485, %v482
      %490 = vst.msk [vmem:[%s192 + $0x10] sm:$0xf] %vm485, %v483
      %491 = vst.msk [vmem:[%s192 + $0x14] sm:$0xf] %vm485, %v484
      %s492 = smul.u32 6, %s19
      %p493 = scmp.lt.s32.totalorder %s18, 1
      %s494 = scalar_select %p493, %s18, 1
      %p495 = scmp.lt.s32.totalorder %s492, 5
      %s496 = scalar_select %p495, %s492, 5
      %s497 = smul.addr %s494, 6
      %s498 = sadd.s32 %s496, %s497
      %s499 = smul.addr %s498, 4
      %s500 = scalar_lea.vmem %s3, %s499
      // Predicated region
      $region33: #{tpu_custom_call.1} parent=31 // pred_check
        %p501 = pneg %p114
      $region34: #{tpu_custom_call.1} parent=31 // pred_check_branch
        %503 = sbr.rel (%p501) target = $region36
      $region35: #{tpu_custom_call.1} parent=31 // pred_region
        %s504 = smul.u32 6, %s19
      $region36: #{tpu_custom_call.1} parent=31 // pred_fallthru
        _
    $region32: #{tpu_custom_call.1} parent=5 // pred_fallthru
      _
    %p505 = scmp.le.s32.totalorder 2, %s9
    // Predicated region
    $region37: #{tpu_custom_call.1} parent=5 // pred_check
      %p506 = pneg %p505
    $region38: #{tpu_custom_call.1} parent=5 // pred_check_branch
      %508 = sbr.rel (%p506) target = $region40
    $region39: #{tpu_custom_call.1} parent=5 // pred_region
      %s509 = ssub.s32 %s9, 2
      // Predicated region
      $region41: #{tpu_custom_call.1} parent=39 // pred_check
        %p510 = pneg %p120
      $region42: #{tpu_custom_call.1} parent=39 // pred_check_branch
        %512 = sbr.rel (%p510) target = $region44
      $region43: #{tpu_custom_call.1} parent=39 // pred_region
        %s513 = smul.u32 6, %s21
        %p514 = scmp.lt.s32.totalorder %s20, 1
        %s515 = scalar_select %p514, %s20, 1
        %p516 = scmp.lt.s32.totalorder %s513, 5
        %s517 = scalar_select %p516, %s513, 5
        %s518 = smul.addr %s515, 6
        %s519 = sadd.s32 %s517, %s518
        %s520 = smul.addr %s519, 4
        %s521 = scalar_lea.vmem %s3, %s520
      $region44: #{tpu_custom_call.1} parent=39 // pred_fallthru
        _
    $region40: #{tpu_custom_call.1} parent=5 // pred_fallthru
      _
  $region6: #{tpu_custom_call.1} parent=0 // loop_footer
    %s13 = sadd.s32 1, %s9
  $region7: #{tpu_custom_call.1} parent=0 // loop_footer_branch
    %8 = sbr.rel target = $region3
  $region8: #{tpu_custom_call.1} parent=0 // loop_exit
    _

</llo_original>
